<compile_context>
chip_gen: v5e
topology: v5e:2x2
jax: 0.10.0
libtpu: 0.0.40
codegen_flags: <defaults>
</compile_context>

<pallas_src>
import jax
import jax.numpy as jnp
from jax.experimental import pallas as pl
from jax.experimental.pallas import tpu as pltpu


def _downsample_kernel(x_ref, w_ref, scale_ref, shift_ref, o_ref):
    """One (image, C_out tile, output-row tile) step of conv3x3/s2 + folded BN.

    x_ref     : (1, 6, th, Wout+1, C_in) bf16.  View v = 2*kh + col_parity
                holds padded input rows 2*ho + kh at columns 2*wc + col_parity.
    w_ref     : (9*C_in, tn) bf16 conv weight, K ordered as (kh, kw, c).
    scale_ref : (1, tn) f32 folded BatchNorm scale.
    shift_ref : (1, tn) f32 folded BatchNorm shift (absorbs bias, mean, beta).
    o_ref     : (1, th*Wout, tn) f32 lane-dense output tile.
    """
    _, _, th, w1, c_in = x_ref.shape
    wout = w1 - 1

    # In-VMEM im2col: gather the nine taps, concatenate once along channels.
    pieces = []
    for kh in range(3):
        for kw in range(3):
            q = 1 if kw == 1 else 0          # column parity of this tap
            c0 = 1 if kw == 2 else 0         # +1 column shift for kw == 2
            pieces.append(x_ref[0, 2 * kh + q, :, c0:c0 + wout, :])
    lhs = jnp.concatenate(pieces, axis=-1)   # (th, Wout, 9*C_in)
    lhs = lhs.reshape(th * wout, 9 * c_in)

    # Single MXU matmul (f32 accumulation) + folded BatchNorm epilogue.
    acc = jnp.dot(lhs, w_ref[...], preferred_element_type=jnp.float32)
    o_ref[0] = (acc * scale_ref[...] + shift_ref[...]).astype(o_ref.dtype)


def _vmem_capacity_bytes():
    try:
        cap = getattr(pltpu.get_tpu_info(), "vmem_capacity_bytes", None)
        if cap:
            return int(cap)
    except Exception:
        pass
    return 64 << 20          # conservative fallback (v7x per-TC)


def _step_vmem_bytes(th, tn, wout, c_in):
    """Approximate double-buffered VMEM footprint of one grid step."""
    cpad = ((c_in + 127) // 128) * 128          # lane-padded channel width
    kpad = ((9 * c_in + 127) // 128) * 128      # lane-padded contraction width
    m = th * wout
    in_b = 6 * th * (wout + 1) * cpad * 2       # bf16 stacked-view block
    w_b = 9 * c_in * tn * 2                     # bf16 weight tile
    out_b = m * tn * 4                          # f32 output tile
    tmp_b = 2 * m * kpad * 2 + m * tn * 4       # im2col temp + matmul result
    return 2 * (in_b + w_b + out_b) + tmp_b


def _choose_tiles(hout, wout, c_in, op, budget_bytes):
    """Pick (row tile th, C_out tile tn) whose step footprint fits the budget."""
    th_cands = [t for t in range(hout, 0, -1)
                if hout % t == 0 and ((t * wout) % 8 == 0 or t == hout)]
    # Prefer row tiles with ~<=1024 output pixels (largest first).
    pref = [t for t in th_cands if t * wout <= 1024] or [th_cands[-1]]
    tn_cands = [t for t in range(op, 0, -128) if op % t == 0]

    for tn in tn_cands:
        for th in pref:
            if _step_vmem_bytes(th, tn, wout, c_in) <= budget_bytes:
                return th, tn
        for th in reversed(th_cands):        # smallest tiles as a fallback
            if _step_vmem_bytes(th, tn, wout, c_in) <= budget_bytes:
                return th, tn
    # TODO(synk): add an output-column grid axis if even (min th, tn=128)
    # overflows the budget at extreme image widths.
    return th_cands[-1], 128


@jax.jit
def downsample_forward(x, params):
    """x: (N, C_in, H, W) NCHW f32 -> (N, C_out, Hout, Wout) NCHW f32."""
    eps = 1e-5
    weight = params["weight"]            # (C_out, C_in, 3, 3)
    bias = params["bias"]                # (C_out,)
    gamma = params["gamma"]
    beta = params["beta"]
    mean = params["running_mean"]
    var = params["running_var"]

    n, c_in, h, w = x.shape
    c_out = weight.shape[0]
    hout = (h - 1) // 2 + 1
    wout = (w - 1) // 2 + 1

    # ---- glue: NCHW -> padded NHWC -> one stacked bf16 operand ---------------
    # views[v] with v = 2*kh + q:  [ho, wc, c] = padded[2*ho + kh, 2*wc + q, c]
    xh = jnp.transpose(x, (0, 2, 3, 1)).astype(jnp.bfloat16)
    hp, wp = 2 * hout + 2, 2 * wout + 2
    xp = jnp.pad(xh, ((0, 0), (1, hp - h - 1), (1, wp - w - 1), (0, 0)))
    xr = xp.reshape(n, hout + 1, 2, wout + 1, 2, c_in)
    rows_even = xr[:, :, 0]              # padded rows 2*hr
    rows_odd = xr[:, :, 1]               # padded rows 2*hr + 1
    v0 = rows_even[:, :hout]             # kh = 0
    v1 = rows_odd[:, :hout]              # kh = 1
    v2 = rows_even[:, 1:hout + 1]        # kh = 2
    xv = jnp.stack([v0[..., 0, :], v0[..., 1, :],
                    v1[..., 0, :], v1[..., 1, :],
                    v2[..., 0, :], v2[..., 1, :]], axis=1)
    # xv: (n, 6, hout, wout+1, c_in) bf16

    # ---- weight (tap-major K) + folded BatchNorm, C_out padded to lanes ------
    op = ((c_out + 127) // 128) * 128
    wk = jnp.transpose(weight, (2, 3, 1, 0)).reshape(9 * c_in, c_out)
    wk = wk.astype(jnp.bfloat16)
    inv_std = 1.0 / jnp.sqrt(var + eps)
    scale = (gamma * inv_std).astype(jnp.float32)
    shift = (beta + (bias - mean) * scale).astype(jnp.float32)
    if op != c_out:
        wk = jnp.pad(wk, ((0, 0), (0, op - c_out)))
        scale = jnp.pad(scale, (0, op - c_out))
        shift = jnp.pad(shift, (0, op - c_out))
    scale = scale[None, :]
    shift = shift[None, :]

    # ---- generation-aware tiling ---------------------------------------------
    vmem_cap = _vmem_capacity_bytes()
    if vmem_cap <= (64 << 20):           # v7x-class: 64 MiB per TensorCore
        budget, limit_cap = 24 << 20, 48 << 20
    else:                                # v5e / v6e: 128 MiB
        budget, limit_cap = 40 << 20, 64 << 20
    th, tn = _choose_tiles(hout, wout, c_in, op, budget)
    j_tiles = op // tn
    r_tiles = hout // th

    vmem_limit = int(min(limit_cap,
                         max(_step_vmem_bytes(th, tn, wout, c_in) + (8 << 20),
                             32 << 20)))

    # ---- grid-axis order by operand size -------------------------------------
    weight_bytes = 9 * c_in * op * 2
    img_bytes = 6 * hout * (wout + 1) * c_in * 2
    weight_outer = weight_bytes > img_bytes and j_tiles > 1
    if weight_outer:
        grid = (j_tiles, n, r_tiles)
        x_map = lambda j, i, r: (i, 0, r, 0, 0)
        w_map = lambda j, i, r: (0, j)
        s_map = lambda j, i, r: (0, j)
        o_map = lambda j, i, r: (i, r, j)
    else:
        grid = (n, j_tiles, r_tiles)
        x_map = lambda i, j, r: (i, 0, r, 0, 0)
        w_map = lambda i, j, r: (0, j)
        s_map = lambda i, j, r: (0, j)
        o_map = lambda i, j, r: (i, r, j)

    cost = pl.CostEstimate(
        flops=2 * n * hout * wout * 9 * c_in * c_out,
        transcendentals=0,
        bytes_accessed=int(n * img_bytes * j_tiles
                           + weight_bytes * (j_tiles if weight_outer
                                             else n * j_tiles)
                           + n * hout * wout * op * 4),
    )

    out = pl.pallas_call(
        _downsample_kernel,
        out_shape=jax.ShapeDtypeStruct((n, hout * wout, op), jnp.float32),
        grid=grid,
        in_specs=[
            pl.BlockSpec((1, 6, th, wout + 1, c_in), x_map),
            pl.BlockSpec((9 * c_in, tn), w_map),
            pl.BlockSpec((1, tn), s_map),
            pl.BlockSpec((1, tn), s_map),
        ],
        out_specs=pl.BlockSpec((1, th * wout, tn), o_map),
        compiler_params=pltpu.CompilerParams(
            dimension_semantics=("parallel", "parallel", "parallel"),
            vmem_limit_bytes=vmem_limit,
        ),
        cost_estimate=cost,
    )(xv, wk, scale, shift)

    out = out.reshape(n, hout, wout, op)[..., :c_out]
    # NHWC -> NCHW to preserve the PyTorch module's layout contract.
    # TODO(synk): callers that can consume NHWC (or bf16) should skip this pass.
    return jnp.transpose(out, (0, 3, 1, 2))


def init_params(key, in_channel, out_channel):
    k_w, k_b, k_g, k_be, k_m, k_v = jax.random.split(key, 6)
    fan_in = in_channel * 3 * 3
    bound = 1.0 / jnp.sqrt(fan_in)
    return {
        "weight": jax.random.uniform(
            k_w, (out_channel, in_channel, 3, 3), jnp.float32, -bound, bound
        ),
        "bias": jax.random.uniform(k_b, (out_channel,), jnp.float32, -bound, bound),
        "gamma": jax.random.uniform(k_g, (out_channel,), jnp.float32, 0.5, 1.5),
        "beta": jax.random.uniform(k_be, (out_channel,), jnp.float32, -0.5, 0.5),
        "running_mean": jax.random.uniform(k_m, (out_channel,), jnp.float32, -0.5, 0.5),
        "running_var": jax.random.uniform(k_v, (out_channel,), jnp.float32, 0.5, 1.5),
    }


def reference_forward(x, params):
    eps = 1e-5
    y = jax.lax.conv_general_dilated(
        x,
        params["weight"],
        window_strides=(2, 2),
        padding=((1, 1), (1, 1)),
        dimension_numbers=("NCHW", "OIHW", "NCHW"),
    )
    y = y + params["bias"][None, :, None, None]
    inv_std = 1.0 / jnp.sqrt(params["running_var"] + eps)
    y = (y - params["running_mean"][None, :, None, None]) * inv_std[None, :, None, None]
    y = y * params["gamma"][None, :, None, None] + params["beta"][None, :, None, None]
    return y


if __name__ == "__main__":
    key = jax.random.PRNGKey(0)
    k_x, k_p = jax.random.split(key)

    N, C_in, H, W = 2, 4, 16, 16
    C_out = 128  # small stand-in for the default 768

    x = jax.random.normal(k_x, (N, C_in, H, W), jnp.float32)
    params = init_params(k_p, C_in, C_out)

    out = jax.block_until_ready(downsample_forward(x, params))
    ref = jax.block_until_ready(reference_forward(x, params))

    assert out.shape == (N, C_out, H // 2, W // 2), out.shape
    # bf16 matmul operands (f32 accumulation) -> ~1% relative agreement.
    max_err = float(jnp.max(jnp.abs(out - ref)))
    assert jnp.allclose(out, ref, rtol=5e-2, atol=5e-2), max_err

    print("KERNEL_OK")
</pallas_src>

<mosaic_0001>
module attributes {stable_mosaic.version = 11 : i64} {
  func.func @_downsample_kernel(%arg0: i32, %arg1: i32, %arg2: i32, %arg3: memref<1x6x8x9x4xbf16, #tpu.memory_space<vmem>>, %arg4: memref<36x128xbf16, #tpu.memory_space<vmem>>, %arg5: memref<1x128xf32, #tpu.memory_space<vmem>>, %arg6: memref<1x128xf32, #tpu.memory_space<vmem>>, %arg7: memref<1x64x128xf32, #tpu.memory_space<vmem>>) attributes {dimension_semantics = [#tpu.dimension_semantics<parallel>, #tpu.dimension_semantics<parallel>, #tpu.dimension_semantics<parallel>], iteration_bounds = array<i64: 2, 1, 1>, scalar_prefetch = 0 : i64, scratch_operands = 0 : i64, tpu.core_type = #tpu.core_type<tc>, window_params = [{transform_indices = @transform_0, window_bounds = array<i64: 1, 6, 8, 9, 4>}, {transform_indices = @transform_1, window_bounds = array<i64: 36, 128>}, {transform_indices = @transform_2, window_bounds = array<i64: 1, 128>}, {transform_indices = @transform_3, window_bounds = array<i64: 1, 128>}, {transform_indices = @transform_4, window_bounds = array<i64: 1, 64, 128>}]} {
    %c0 = arith.constant 0 : index
    %c0_0 = arith.constant 0 : index
    %c0_1 = arith.constant 0 : index
    %c0_2 = arith.constant 0 : index
    %c0_3 = arith.constant 0 : index
    %0 = vector.load %arg3[%c0, %c0_0, %c0_1, %c0_2, %c0_3] : memref<1x6x8x9x4xbf16, #tpu.memory_space<vmem>>, vector<1x1x8x8x4xbf16>
    %1 = vector.shape_cast %0 : vector<1x1x8x8x4xbf16> to vector<8x8x4xbf16>
    %c0_4 = arith.constant 0 : index
    %c1 = arith.constant 1 : index
    %c0_5 = arith.constant 0 : index
    %c0_6 = arith.constant 0 : index
    %c0_7 = arith.constant 0 : index
    %2 = vector.load %arg3[%c0_4, %c1, %c0_5, %c0_6, %c0_7] : memref<1x6x8x9x4xbf16, #tpu.memory_space<vmem>>, vector<1x1x8x8x4xbf16>
    %3 = vector.shape_cast %2 : vector<1x1x8x8x4xbf16> to vector<8x8x4xbf16>
    %c0_8 = arith.constant 0 : index
    %c0_9 = arith.constant 0 : index
    %c0_10 = arith.constant 0 : index
    %c1_11 = arith.constant 1 : index
    %c0_12 = arith.constant 0 : index
    %4 = vector.load %arg3[%c0_8, %c0_9, %c0_10, %c1_11, %c0_12] : memref<1x6x8x9x4xbf16, #tpu.memory_space<vmem>>, vector<1x1x8x8x4xbf16>
    %5 = vector.shape_cast %4 : vector<1x1x8x8x4xbf16> to vector<8x8x4xbf16>
    %c0_13 = arith.constant 0 : index
    %c2 = arith.constant 2 : index
    %c0_14 = arith.constant 0 : index
    %c0_15 = arith.constant 0 : index
    %c0_16 = arith.constant 0 : index
    %6 = vector.load %arg3[%c0_13, %c2, %c0_14, %c0_15, %c0_16] : memref<1x6x8x9x4xbf16, #tpu.memory_space<vmem>>, vector<1x1x8x8x4xbf16>
    %7 = vector.shape_cast %6 : vector<1x1x8x8x4xbf16> to vector<8x8x4xbf16>
    %c0_17 = arith.constant 0 : index
    %c3 = arith.constant 3 : index
    %c0_18 = arith.constant 0 : index
    %c0_19 = arith.constant 0 : index
    %c0_20 = arith.constant 0 : index
    %8 = vector.load %arg3[%c0_17, %c3, %c0_18, %c0_19, %c0_20] : memref<1x6x8x9x4xbf16, #tpu.memory_space<vmem>>, vector<1x1x8x8x4xbf16>
    %9 = vector.shape_cast %8 : vector<1x1x8x8x4xbf16> to vector<8x8x4xbf16>
    %c0_21 = arith.constant 0 : index
    %c2_22 = arith.constant 2 : index
    %c0_23 = arith.constant 0 : index
    %c1_24 = arith.constant 1 : index
    %c0_25 = arith.constant 0 : index
    %10 = vector.load %arg3[%c0_21, %c2_22, %c0_23, %c1_24, %c0_25] : memref<1x6x8x9x4xbf16, #tpu.memory_space<vmem>>, vector<1x1x8x8x4xbf16>
    %11 = vector.shape_cast %10 : vector<1x1x8x8x4xbf16> to vector<8x8x4xbf16>
    %c0_26 = arith.constant 0 : index
    %c4 = arith.constant 4 : index
    %c0_27 = arith.constant 0 : index
    %c0_28 = arith.constant 0 : index
    %c0_29 = arith.constant 0 : index
    %12 = vector.load %arg3[%c0_26, %c4, %c0_27, %c0_28, %c0_29] : memref<1x6x8x9x4xbf16, #tpu.memory_space<vmem>>, vector<1x1x8x8x4xbf16>
    %13 = vector.shape_cast %12 : vector<1x1x8x8x4xbf16> to vector<8x8x4xbf16>
    %c0_30 = arith.constant 0 : index
    %c5 = arith.constant 5 : index
    %c0_31 = arith.constant 0 : index
    %c0_32 = arith.constant 0 : index
    %c0_33 = arith.constant 0 : index
    %14 = vector.load %arg3[%c0_30, %c5, %c0_31, %c0_32, %c0_33] : memref<1x6x8x9x4xbf16, #tpu.memory_space<vmem>>, vector<1x1x8x8x4xbf16>
    %15 = vector.shape_cast %14 : vector<1x1x8x8x4xbf16> to vector<8x8x4xbf16>
    %c0_34 = arith.constant 0 : index
    %c4_35 = arith.constant 4 : index
    %c0_36 = arith.constant 0 : index
    %c1_37 = arith.constant 1 : index
    %c0_38 = arith.constant 0 : index
    %16 = vector.load %arg3[%c0_34, %c4_35, %c0_36, %c1_37, %c0_38] : memref<1x6x8x9x4xbf16, #tpu.memory_space<vmem>>, vector<1x1x8x8x4xbf16>
    %17 = vector.shape_cast %16 : vector<1x1x8x8x4xbf16> to vector<8x8x4xbf16>
    %18 = tpu.concatenate %1, %3, %5, %7, %9, %11, %13, %15, %17 in 2 : vector<8x8x4xbf16>, vector<8x8x4xbf16>, vector<8x8x4xbf16>, vector<8x8x4xbf16>, vector<8x8x4xbf16>, vector<8x8x4xbf16>, vector<8x8x4xbf16>, vector<8x8x4xbf16>, vector<8x8x4xbf16> -> vector<8x8x36xbf16>
    %19 = vector.shape_cast %18 : vector<8x8x36xbf16> to vector<64x36xbf16>
    %c0_39 = arith.constant 0 : index
    %c0_40 = arith.constant 0 : index
    %20 = vector.load %arg4[%c0_39, %c0_40] : memref<36x128xbf16, #tpu.memory_space<vmem>>, vector<36x128xbf16>
    %cst = arith.constant dense<0.000000e+00> : vector<64x128xf32>
    %21 = tpu.matmul %19, %20, %cst {dimension_numbers = #tpu.dot_dimension_numbers<[1], [0], [0], [1], [0, 0, 1, 1], [], []>} : vector<64x36xbf16>, vector<36x128xbf16>, vector<64x128xf32> -> vector<64x128xf32>
    %c0_41 = arith.constant 0 : index
    %c0_42 = arith.constant 0 : index
    %22 = vector.load %arg5[%c0_41, %c0_42] : memref<1x128xf32, #tpu.memory_space<vmem>>, vector<1x128xf32>
    %23 = vector.broadcast %22 : vector<1x128xf32> to vector<64x128xf32>
    %24 = arith.mulf %21, %23 : vector<64x128xf32>
    %c0_43 = arith.constant 0 : index
    %c0_44 = arith.constant 0 : index
    %25 = vector.load %arg6[%c0_43, %c0_44] : memref<1x128xf32, #tpu.memory_space<vmem>>, vector<1x128xf32>
    %26 = vector.broadcast %25 : vector<1x128xf32> to vector<64x128xf32>
    %27 = arith.addf %24, %26 : vector<64x128xf32>
    %c0_45 = arith.constant 0 : index
    %c0_46 = arith.constant 0 : index
    %c0_47 = arith.constant 0 : index
    %28 = vector.load %arg7[%c0_45, %c0_46, %c0_47] : memref<1x64x128xf32, #tpu.memory_space<vmem>>, vector<1x64x128xf32>
    %29 = vector.shape_cast %28 : vector<1x64x128xf32> to vector<64x128xf32>
    %30 = vector.shape_cast %27 : vector<64x128xf32> to vector<1x64x128xf32>
    tpu.vector_store %arg7[%c0_45, %c0_46, %c0_47], %30 {strides = array<i32>} : memref<1x64x128xf32, #tpu.memory_space<vmem>>, vector<1x64x128xf32>,
    return
  }
  func.func @transform_0(%arg0: i32, %arg1: i32, %arg2: i32) -> (i32, i32, i32, i32, i32) {
    %c0_i32 = arith.constant 0 : i32
    %c0_i32_0 = arith.constant 0 : i32
    %c0_i32_1 = arith.constant 0 : i32
    %c0_i32_2 = arith.constant 0 : i32
    return %arg0, %c0_i32, %arg2, %c0_i32_0, %c0_i32_1 : i32, i32, i32, i32, i32
  }
  func.func @transform_1(%arg0: i32, %arg1: i32, %arg2: i32) -> (i32, i32) {
    %c0_i32 = arith.constant 0 : i32
    %c0_i32_0 = arith.constant 0 : i32
    return %c0_i32, %arg1 : i32, i32
  }
  func.func @transform_2(%arg0: i32, %arg1: i32, %arg2: i32) -> (i32, i32) {
    %c0_i32 = arith.constant 0 : i32
    %c0_i32_0 = arith.constant 0 : i32
    return %c0_i32, %arg1 : i32, i32
  }
  func.func @transform_3(%arg0: i32, %arg1: i32, %arg2: i32) -> (i32, i32) {
    %c0_i32 = arith.constant 0 : i32
    %c0_i32_0 = arith.constant 0 : i32
    return %c0_i32, %arg1 : i32, i32
  }
  func.func @transform_4(%arg0: i32, %arg1: i32, %arg2: i32) -> (i32, i32, i32) {
    %c0_i32 = arith.constant 0 : i32
    return %arg0, %arg2, %arg1 : i32, i32, i32
  }
}

</mosaic_0001>

<llo_original>
// kernel: downsample_forward.1
$region0: #{downsample_forward.1}
  #allocation0 [shape = 'u32[]', space=smem, size = 0x4, offset = 0x4, fixed_abs, tag = 'smem constant byte address 0x4 - core index']
  #allocation1 [shape = 'u32[72,128]{1,0:T(1,128)}', space=vmem, size = 0x9000, scoped, tag = 'internal scratch']
  %s0 = inlined_call_operand.vmem [shape: bf16[2,6,8,9,4], index: 0, kind: input, shape index: {}]
  %s1 = inlined_call_operand.vmem [shape: bf16[36,128], index: 1, kind: input, shape index: {}]
  %s2 = inlined_call_operand.vmem [shape: f32[1,128], index: 2, kind: input, shape index: {}]
  %s3 = inlined_call_operand.vmem [shape: f32[1,128], index: 3, kind: input, shape index: {}]
  %s4 = inlined_call_operand.hbm [shape: f32[2,64,128], index: 4, kind: output, shape index: {}]
  %s5 = sld [smem:[#allocation0]]
  $region49: #{downsample_forward.1} parent=0
    _
  %s7 = ssub.s32 1, %s5
  %s8 = scalar_select 0, %s7, %s5
  $region1: #{downsample_forward.1} parent=0
    #allocation2 [shape = 'u8[65536]{0}', space=vmem, size = 0x10000, scoped, tag = 'output window, operand 0']
    #allocation3 [shape = 's32[2]{0}', space=sflag, size = 0x8, scoped, tag = 'scoped memory for downsample_forward.1']
    %9 = vsyncpa [#allocation3], 0
    %s10 = scalar_lea.sflag [#allocation3], 1
    %11 = vsyncpa %s10, 0
    loop: start=0, step=1, limit=4
    $region2: #{downsample_forward.1} parent=1 // loop_pre_header
      _
    $region3: #{downsample_forward.1} parent=1 // loop_header
      %s13 = sphi 0, %s17
      %p14 = scmp.ge.s32.totalorder %s13, 4
      %s20 = sphi 0, %s39
      %s21 = sphi 0, %s35
      %s22 = sphi 0, %s31
      %s23 = sphi 0, %s20
      %s24 = sphi 0, %s21
      %s25 = sphi 0, %s22
      %s26 = sphi 0, %s23
      %s27 = sphi 0, %s24
      %s28 = sphi 0, %s25
      %s44 = sphi 0, %s46
      %s47 = sphi 0, %s44
      %s48 = sphi 0, %s47
      %s64 = sphi 0, %s48
      %s70 = sphi 0, %s72
      %s73 = sphi 0, %s70
      %s74 = sphi 0, %s73
      %s90 = sphi 0, %s74
      %s96 = sphi 0, %s98
      %s99 = sphi 0, %s96
      %s100 = sphi 0, %s99
      %s116 = sphi 0, %s100
      %s122 = sphi 0, %s124
      %s125 = sphi 0, %s122
      %s126 = sphi 0, %s125
      %s142 = sphi 0, %s126
      %s152 = sphi 0, %s154
      %s155 = sphi 0, %s152
      %s156 = sphi 0, %s155
      %s172 = sphi 0, %s156
    $region4: #{downsample_forward.1} parent=1 // loop_header_branch
      %16 = sbr.rel (%p14) target = $region8
    $region5: #{downsample_forward.1} parent=1 // loop_body
      %s18 = ssub.s32 %s13, 1
      %s19 = ssub.s32 %s13, 2
      %s29 = sadd.s32 1, %s22
      %p30 = scmp.ge.s32.totalorder %s29, 1
      %s31 = scalar_select %p30, 0, %s29
      %s32 = sadd.s32 1, %s21
      %s33 = scalar_select %p30, %s32, %s21
      %p34 = scmp.ge.s32.totalorder %s33, 1
      %s35 = scalar_select %p34, 0, %s33
      %s36 = sadd.s32 1, %s20
      %s37 = scalar_select %p34, %s36, %s20
      %p38 = scmp.ge.s32.totalorder %s37, 2
      %s39 = scalar_select %p38, 0, %s37
      %s40 = ssub.s32 %s20, %s39
      %s41 = ssub.s32 %s22, %s31
      %s42 = sor.u32 %s40, %s41
      %p43 = scmp.eq.s32.totalorder %s42, 0
      %s45 = sadd.s32 %s44, 1
      %s46 = scalar_select %p43, %s44, %s45
      %p49 = pneg %p43
      %p50 = scmp.eq.s32.totalorder %s13, 1
      %p51 = por %p49, %p50
      %p52 = scmp.ne.s32.totalorder %s44, %s47
      %p53 = scmp.eq.s32.totalorder %s13, 0
      %p54 = por %p52, %p53
      %p55 = scmp.ne.s32.totalorder %s44, %s47
      %p56 = scmp.eq.s32.totalorder %s18, 1
      %p57 = por %p55, %p56
      %p58 = scmp.ne.s32.totalorder %s47, %s48
      %p59 = scmp.eq.s32.totalorder %s18, 0
      %p60 = por %p58, %p59
      %p61 = scmp.ne.s32.totalorder %s47, %s48
      %p62 = scmp.eq.s32.totalorder %s19, 1
      %p63 = por %p61, %p62
      %p65 = scmp.ne.s32.totalorder %s48, %s64
      %p66 = scmp.eq.s32.totalorder %s19, 0
      %p67 = por %p65, %p66
      %s68 = ssub.s32 %s21, %s35
      %p69 = scmp.eq.s32.totalorder %s68, 0
      %s71 = sadd.s32 %s70, 1
      %s72 = scalar_select %p69, %s70, %s71
      %p75 = pneg %p69
      %p76 = scmp.eq.s32.totalorder %s13, 1
      %p77 = por %p75, %p76
      %p78 = scmp.ne.s32.totalorder %s70, %s73
      %p79 = scmp.eq.s32.totalorder %s13, 0
      %p80 = por %p78, %p79
      %p81 = scmp.ne.s32.totalorder %s70, %s73
      %p82 = scmp.eq.s32.totalorder %s18, 1
      %p83 = por %p81, %p82
      %p84 = scmp.ne.s32.totalorder %s73, %s74
      %p85 = scmp.eq.s32.totalorder %s18, 0
      %p86 = por %p84, %p85
      %p87 = scmp.ne.s32.totalorder %s73, %s74
      %p88 = scmp.eq.s32.totalorder %s19, 1
      %p89 = por %p87, %p88
      %p91 = scmp.ne.s32.totalorder %s74, %s90
      %p92 = scmp.eq.s32.totalorder %s19, 0
      %p93 = por %p91, %p92
      %s94 = ssub.s32 %s21, %s35
      %p95 = scmp.eq.s32.totalorder %s94, 0
      %s97 = sadd.s32 %s96, 1
      %s98 = scalar_select %p95, %s96, %s97
      %p101 = pneg %p95
      %p102 = scmp.eq.s32.totalorder %s13, 1
      %p103 = por %p101, %p102
      %p104 = scmp.ne.s32.totalorder %s96, %s99
      %p105 = scmp.eq.s32.totalorder %s13, 0
      %p106 = por %p104, %p105
      %p107 = scmp.ne.s32.totalorder %s96, %s99
      %p108 = scmp.eq.s32.totalorder %s18, 1
      %p109 = por %p107, %p108
      %p110 = scmp.ne.s32.totalorder %s99, %s100
      %p111 = scmp.eq.s32.totalorder %s18, 0
      %p112 = por %p110, %p111
      %p113 = scmp.ne.s32.totalorder %s99, %s100
      %p114 = scmp.eq.s32.totalorder %s19, 1
      %p115 = por %p113, %p114
      %p117 = scmp.ne.s32.totalorder %s100, %s116
      %p118 = scmp.eq.s32.totalorder %s19, 0
      %p119 = por %p117, %p118
      %s120 = ssub.s32 %s21, %s35
      %p121 = scmp.eq.s32.totalorder %s120, 0
      %s123 = sadd.s32 %s122, 1
      %s124 = scalar_select %p121, %s122, %s123
      %p127 = pneg %p121
      %p128 = scmp.eq.s32.totalorder %s13, 1
      %p129 = por %p127, %p128
      %p130 = scmp.ne.s32.totalorder %s122, %s125
      %p131 = scmp.eq.s32.totalorder %s13, 0
      %p132 = por %p130, %p131
      %p133 = scmp.ne.s32.totalorder %s122, %s125
      %p134 = scmp.eq.s32.totalorder %s18, 1
      %p135 = por %p133, %p134
      %p136 = scmp.ne.s32.totalorder %s125, %s126
      %p137 = scmp.eq.s32.totalorder %s18, 0
      %p138 = por %p136, %p137
      %p139 = scmp.ne.s32.totalorder %s125, %s126
      %p140 = scmp.eq.s32.totalorder %s19, 1
      %p141 = por %p139, %p140
      %p143 = scmp.ne.s32.totalorder %s126, %s142
      %p144 = scmp.eq.s32.totalorder %s19, 0
      %p145 = por %p143, %p144
      %s146 = ssub.s32 %s20, %s39
      %s147 = ssub.s32 %s22, %s31
      %s148 = sor.u32 %s146, %s147
      %s149 = ssub.s32 %s21, %s35
      %s150 = sor.u32 %s148, %s149
      %p151 = scmp.eq.s32.totalorder %s150, 0
      %s153 = sadd.s32 %s152, 1
      %s154 = scalar_select %p151, %s152, %s153
      %p157 = pneg %p151
      %p158 = scmp.eq.s32.totalorder %s13, 1
      %p159 = por %p157, %p158
      %p160 = scmp.ne.s32.totalorder %s152, %s155
      %p161 = scmp.eq.s32.totalorder %s13, 0
      %p162 = por %p160, %p161
      %p163 = scmp.ne.s32.totalorder %s152, %s155
      %p164 = scmp.eq.s32.totalorder %s18, 1
      %p165 = por %p163, %p164
      %p166 = scmp.ne.s32.totalorder %s155, %s156
      %p167 = scmp.eq.s32.totalorder %s18, 0
      %p168 = por %p166, %p167
      %p169 = scmp.ne.s32.totalorder %s155, %s156
      %p170 = scmp.eq.s32.totalorder %s19, 1
      %p171 = por %p169, %p170
      %p173 = scmp.ne.s32.totalorder %s156, %s172
      %p174 = scmp.eq.s32.totalorder %s19, 0
      %p175 = por %p173, %p174
      %p176 = scmp.le.s32.totalorder 1, %s13
      %p177 = scmp.lt.s32.totalorder %s13, 3
      %p178 = pnand %p176, %p177
      %p179 = pneg %p178
      // Predicated region
      $region9: #{downsample_forward.1} parent=5 // pred_check
        _
      $region10: #{downsample_forward.1} parent=5 // pred_check_branch
        %181 = sbr.rel (%p178) target = $region12
      $region11: #{downsample_forward.1} parent=5 // pred_region
        %s182 = ssub.s32 %s13, 1
        // Predicated region
        $region13: #{downsample_forward.1} parent=11 // pred_check
          %p183 = pneg %p86
        $region14: #{downsample_forward.1} parent=11 // pred_check_branch
          %185 = sbr.rel (%p183) target = $region16
        $region15: #{downsample_forward.1} parent=11 // pred_region
          %p186 = scmp.lt.s32.totalorder %s24, 0
          %s187 = scalar_select %p186, %s24, 0
          %s188 = smul.addr %s187, 4
          %s189 = scalar_lea.vmem %s1, %s188
        $region16: #{downsample_forward.1} parent=11 // pred_fallthru
          _
        // Predicated region
        $region17: #{downsample_forward.1} parent=11 // pred_check
          %p190 = pneg %p112
        $region18: #{downsample_forward.1} parent=11 // pred_check_branch
          %192 = sbr.rel (%p190) target = $region20
        $region19: #{downsample_forward.1} parent=11 // pred_region
          %p193 = scmp.lt.s32.totalorder %s24, 0
          %s194 = scalar_select %p193, %s24, 0
          %s195 = scalar_lea.vmem %s2, %s194
        $region20: #{downsample_forward.1} parent=11 // pred_fallthru
          _
        // Predicated region
        $region21: #{downsample_forward.1} parent=11 // pred_check
          %p196 = pneg %p138
        $region22: #{downsample_forward.1} parent=11 // pred_check_branch
          %198 = sbr.rel (%p196) target = $region24
        $region23: #{downsample_forward.1} parent=11 // pred_region
          %p199 = scmp.lt.s32.totalorder %s24, 0
          %s200 = scalar_select %p199, %s24, 0
          %s201 = scalar_lea.vmem %s3, %s200
        $region24: #{downsample_forward.1} parent=11 // pred_fallthru
          _
      $region12: #{downsample_forward.1} parent=5 // pred_fallthru
        _
      %p202 = scmp.lt.s32.totalorder %s13, 2
      // Predicated region
      $region25: #{downsample_forward.1} parent=5 // pred_check
        %p203 = pneg %p202
      $region26: #{downsample_forward.1} parent=5 // pred_check_branch
        %205 = sbr.rel (%p203) target = $region28
      $region27: #{downsample_forward.1} parent=5 // pred_region
        // Predicated region
        $region29: #{downsample_forward.1} parent=27 // pred_check
          %p206 = pneg %p54
        $region30: #{downsample_forward.1} parent=27 // pred_check_branch
          %208 = sbr.rel (%p206) target = $region32
        $region31: #{downsample_forward.1} parent=27 // pred_region
          %s209 = smul.u32 8, %s22
          %p210 = scmp.lt.s32.totalorder %s20, 1
          %s211 = scalar_select %p210, %s20, 1
          %p212 = scmp.lt.s32.totalorder %s209, 7
          %s213 = scalar_select %p212, %s209, 7
          %s214 = smul.addr %s213, 2
          %s215 = smul.addr %s211, 96
          %s216 = sadd.s32 %s214, %s215
          %s217 = smul.addr %s216, 4
          %s218 = scalar_lea.vmem %s0, %s217
          %s219 = smul.u32 8, %s22
        $region32: #{downsample_forward.1} parent=27 // pred_fallthru
          _
      $region28: #{downsample_forward.1} parent=5 // pred_fallthru
        _
      %p220 = scmp.le.s32.totalorder 1, %s13
      %p221 = scmp.lt.s32.totalorder %s13, 3
      %p222 = pnand %p220, %p221
      %p223 = pneg %p222
      // Predicated region
      $region33: #{downsample_forward.1} parent=5 // pred_check
        _
      $region34: #{downsample_forward.1} parent=5 // pred_check_branch
        %225 = sbr.rel (%p222) target = $region36
      $region35: #{downsample_forward.1} parent=5 // pred_region
        %s226 = ssub.s32 %s13, 1
        %s227 = smul.u32 8, %s25
        %p228 = scmp.lt.s32.totalorder %s23, 1
        %s229 = scalar_select %p228, %s23, 1
        %p230 = scmp.lt.s32.totalorder %s227, 7
        %s231 = scalar_select %p230, %s227, 7
        %s232 = smul.addr %s231, 2
        %s233 = smul.addr %s229, 96
        %s234 = sadd.s32 %s232, %s233
        %s235 = smul.addr %s234, 4
        %s236 = scalar_lea.vmem %s0, %s235
        %p237 = pneg %p60
        %p238 = pneg %p57
        %p239 = scmp.lt.s32.totalorder %s24, 0
        %s240 = scalar_select %p239, %s24, 0
        %s241 = smul.addr %s240, 4
        %s242 = scalar_lea.vmem %s1, %s241
        %p243 = pneg %p86
        %p244 = pneg %p83
        %p245 = scmp.lt.s32.totalorder %s24, 0
        %s246 = scalar_select %p245, %s24, 0
        %s247 = scalar_lea.vmem %s2, %s246
        %p248 = pneg %p112
        %p249 = pneg %p109
        %p250 = scmp.lt.s32.totalorder %s24, 0
        %s251 = scalar_select %p250, %s24, 0
        %s252 = scalar_lea.vmem %s3, %s251
        %p253 = pneg %p138
        %p254 = pneg %p135
        %p255 = pneg %p168
        %p256 = pneg %p165
        %s257 = sand.u32 %s155, 1
        %s258 = scalar_lea.sflag [#allocation3], %s257
        %s259 = sand.u32 %s155, 1
        %s260 = smul.addr %s259, 64
        %s261 = scalar_lea.vmem [#allocation2], %s260
        %s262 = smul.u32 8, %s25
        %p263 = scmp.lt.s32.totalorder %s23, 1
        %s264 = scalar_select %p263, %s23, 1
        %p265 = scmp.lt.s32.totalorder %s262, 7
        %s266 = scalar_select %p265, %s262, 7
        %s267 = smul.addr %s266, 2
        %s268 = smul.addr %s264, 96
        %s269 = sadd.s32 %s267, %s268
        %s270 = smul.addr %s269, 4
        %s271 = scalar_lea.vmem %s0, %s270
        %s272 = smul.u32 8, %s25
        %p273 = scmp.lt.s32.totalorder %s24, 0
        %s274 = scalar_select %p273, %s24, 0
        %s275 = smul.addr %s274, 4
        %s276 = scalar_lea.vmem %s1, %s275
        %p277 = scmp.lt.s32.totalorder %s24, 0
        %s278 = scalar_select %p277, %s24, 0
        %s279 = scalar_lea.vmem %s2, %s278
        %p280 = scmp.lt.s32.totalorder %s24, 0
        %s281 = scalar_select %p280, %s24, 0
        %s282 = scalar_lea.vmem %s3, %s281
        %s283 = smul.u32 8, %s25
        %v285 = vld [vmem:[%s271] sm:$0xf]
        %v286 = vld [vmem:[%s271 + $0x8] sm:$0xf]
        %v287 = vld [vmem:[%s271 + $0x10] sm:$0xf]
        %v288 = vld [vmem:[%s271 + $0x18] sm:$0xf]
        %v289 = vld [vmem:[%s271 + $0x20] sm:$0xf]
        %v290 = vld [vmem:[%s271 + $0x28] sm:$0xf]
        %v291 = vld [vmem:[%s271 + $0x30] sm:$0xf]
        %v292 = vld [vmem:[%s271 + $0x38] sm:$0xf]
        %s293 = scalar_lea.vmem %s271, 64
        %v294 = vld [vmem:[%s293] sm:$0xf]
        %v295 = vld [vmem:[%s293 + $0x8] sm:$0xf]
        %v296 = vld [vmem:[%s293 + $0x10] sm:$0xf]
        %v297 = vld [vmem:[%s293 + $0x18] sm:$0xf]
        %v298 = vld [vmem:[%s293 + $0x20] sm:$0xf]
        %v299 = vld [vmem:[%s293 + $0x28] sm:$0xf]
        %v300 = vld [vmem:[%s293 + $0x30] sm:$0xf]
        %v301 = vld [vmem:[%s293 + $0x38] sm:$0xf]
        %v302 = vld [vmem:[%s271 + $0x4] sm:$0x1]
        %v303 = vld [vmem:[%s271 + $0xc] sm:$0x1]
        %v304 = vld [vmem:[%s271 + $0x14] sm:$0x1]
        %v305 = vld [vmem:[%s271 + $0x1c] sm:$0x1]
        %v306 = vld [vmem:[%s271 + $0x24] sm:$0x1]
        %v307 = vld [vmem:[%s271 + $0x2c] sm:$0x1]
        %v308 = vld [vmem:[%s271 + $0x34] sm:$0x1]
        %v309 = vld [vmem:[%s271 + $0x3c] sm:$0x1]
        %s310 = scalar_lea.vmem %s271, 128
        %v311 = vld [vmem:[%s310] sm:$0xf]
        %v312 = vld [vmem:[%s310 + $0x8] sm:$0xf]
        %v313 = vld [vmem:[%s310 + $0x10] sm:$0xf]
        %v314 = vld [vmem:[%s310 + $0x18] sm:$0xf]
        %v315 = vld [vmem:[%s310 + $0x20] sm:$0xf]
        %v316 = vld [vmem:[%s310 + $0x28] sm:$0xf]
        %v317 = vld [vmem:[%s310 + $0x30] sm:$0xf]
        %v318 = vld [vmem:[%s310 + $0x38] sm:$0xf]
        %s319 = scalar_lea.vmem %s271, 192
        %v320 = vld [vmem:[%s319] sm:$0xf]
        %v321 = vld [vmem:[%s319 + $0x8] sm:$0xf]
        %v322 = vld [vmem:[%s319 + $0x10] sm:$0xf]
        %v323 = vld [vmem:[%s319 + $0x18] sm:$0xf]
        %v324 = vld [vmem:[%s319 + $0x20] sm:$0xf]
        %v325 = vld [vmem:[%s319 + $0x28] sm:$0xf]
        %v326 = vld [vmem:[%s319 + $0x30] sm:$0xf]
        %v327 = vld [vmem:[%s319 + $0x38] sm:$0xf]
        %v328 = vld [vmem:[%s310 + $0x4] sm:$0x1]
        %v329 = vld [vmem:[%s310 + $0xc] sm:$0x1]
        %v330 = vld [vmem:[%s310 + $0x14] sm:$0x1]
        %v331 = vld [vmem:[%s310 + $0x1c] sm:$0x1]
        %v332 = vld [vmem:[%s310 + $0x24] sm:$0x1]
        %v333 = vld [vmem:[%s310 + $0x2c] sm:$0x1]
        %v334 = vld [vmem:[%s310 + $0x34] sm:$0x1]
        %v335 = vld [vmem:[%s310 + $0x3c] sm:$0x1]
        %s336 = scalar_lea.vmem %s271, 256
        %v337 = vld [vmem:[%s336] sm:$0xf]
        %v338 = vld [vmem:[%s336 + $0x8] sm:$0xf]
        %v339 = vld [vmem:[%s336 + $0x10] sm:$0xf]
        %v340 = vld [vmem:[%s336 + $0x18] sm:$0xf]
        %v341 = vld [vmem:[%s336 + $0x20] sm:$0xf]
        %v342 = vld [vmem:[%s336 + $0x28] sm:$0xf]
        %v343 = vld [vmem:[%s336 + $0x30] sm:$0xf]
        %v344 = vld [vmem:[%s336 + $0x38] sm:$0xf]
        %s345 = scalar_lea.vmem %s271, 320
        %v346 = vld [vmem:[%s345] sm:$0xf]
        %v347 = vld [vmem:[%s345 + $0x8] sm:$0xf]
        %v348 = vld [vmem:[%s345 + $0x10] sm:$0xf]
        %v349 = vld [vmem:[%s345 + $0x18] sm:$0xf]
        %v350 = vld [vmem:[%s345 + $0x20] sm:$0xf]
        %v351 = vld [vmem:[%s345 + $0x28] sm:$0xf]
        %v352 = vld [vmem:[%s345 + $0x30] sm:$0xf]
        %v353 = vld [vmem:[%s345 + $0x38] sm:$0xf]
        %v354 = vld [vmem:[%s336 + $0x4] sm:$0x1]
        %v355 = vld [vmem:[%s336 + $0xc] sm:$0x1]
        %v356 = vld [vmem:[%s336 + $0x14] sm:$0x1]
        %v357 = vld [vmem:[%s336 + $0x1c] sm:$0x1]
        %v358 = vld [vmem:[%s336 + $0x24] sm:$0x1]
        %v359 = vld [vmem:[%s336 + $0x2c] sm:$0x1]
        %v360 = vld [vmem:[%s336 + $0x34] sm:$0x1]
        %v361 = vld [vmem:[%s336 + $0x3c] sm:$0x1]
        %v370 = vunpack.c.l.b16 %v294
        %v371 = vunpack.c.l.b16 %v295
        %v372 = vunpack.c.l.b16 %v296
        %v373 = vunpack.c.l.b16 %v297
        %v374 = vunpack.c.l.b16 %v298
        %v375 = vunpack.c.l.b16 %v299
        %v376 = vunpack.c.l.b16 %v300
        %v377 = vunpack.c.l.b16 %v301
        %v378 = vpack.c.b16 %v370, %v370
        %v379 = vpack.c.b16 %v371, %v371
        %v380 = vpack.c.b16 %v372, %v372
        %v381 = vpack.c.b16 %v373, %v373
        %v382 = vpack.c.b16 %v374, %v374
        %v383 = vpack.c.b16 %v375, %v375
        %v384 = vpack.c.b16 %v376, %v376
        %v385 = vpack.c.b16 %v377, %v377
        %386 = vrot.lane.b32.xlu0 %v378, 4
        %v387 = vpop.permute.xlu0 %386
        %388 = vrot.lane.b32.xlu0 %v379, 4
        %v389 = vpop.permute.xlu0 %388
        %390 = vrot.lane.b32.xlu0 %v380, 4
        %v391 = vpop.permute.xlu0 %390
        %392 = vrot.lane.b32.xlu0 %v381, 4
        %v393 = vpop.permute.xlu0 %392
        %394 = vrot.lane.b32.xlu0 %v382, 4
        %v395 = vpop.permute.xlu0 %394
        %396 = vrot.lane.b32.xlu0 %v383, 4
        %v397 = vpop.permute.xlu0 %396
        %398 = vrot.lane.b32.xlu0 %v384, 4
        %v399 = vpop.permute.xlu0 %398
        %400 = vrot.lane.b32.xlu0 %v385, 4
        %v401 = vpop.permute.xlu0 %400
        %v418 = vunpack.c.l.b16 %v285
        %v419 = vunpack.c.l.b16 %v302
        %v420 = vunpack.c.l.b16 %v286
        %v421 = vunpack.c.l.b16 %v303
        %v422 = vunpack.c.l.b16 %v287
        %v423 = vunpack.c.l.b16 %v304
        %v424 = vunpack.c.l.b16 %v288
        %v425 = vunpack.c.l.b16 %v305
        %v426 = vunpack.c.l.b16 %v289
        %v427 = vunpack.c.l.b16 %v306
        %v428 = vunpack.c.l.b16 %v290
        %v429 = vunpack.c.l.b16 %v307
        %v430 = vunpack.c.l.b16 %v291
        %v431 = vunpack.c.l.b16 %v308
        %v432 = vunpack.c.l.b16 %v292
        %v433 = vunpack.c.l.b16 %v309
        %v434 = vpack.c.b16 %v419, %v418
        %v435 = vpack.c.b16 %v421, %v420
        %v436 = vpack.c.b16 %v423, %v422
        %v437 = vpack.c.b16 %v425, %v424
        %v438 = vpack.c.b16 %v427, %v426
        %v439 = vpack.c.b16 %v429, %v428
        %v440 = vpack.c.b16 %v431, %v430
        %v441 = vpack.c.b16 %v433, %v432
        %v443 = vshrl.u32 %v434, 16
        %v445 = vshll.u32 %v434, 16
        %v447 = vrot.slane %v445, 1
        %v448 = vor.u32 %v443, %v447
        %v450 = vshrl.u32 %v435, 16
        %v452 = vshll.u32 %v435, 16
        %v454 = vrot.slane %v452, 1
        %v455 = vor.u32 %v450, %v454
        %v457 = vshrl.u32 %v436, 16
        %v459 = vshll.u32 %v436, 16
        %v461 = vrot.slane %v459, 1
        %v462 = vor.u32 %v457, %v461
        %v464 = vshrl.u32 %v437, 16
        %v466 = vshll.u32 %v437, 16
        %v468 = vrot.slane %v466, 1
        %v469 = vor.u32 %v464, %v468
        %v471 = vshrl.u32 %v438, 16
        %v473 = vshll.u32 %v438, 16
        %v475 = vrot.slane %v473, 1
        %v476 = vor.u32 %v471, %v475
        %v478 = vshrl.u32 %v439, 16
        %v480 = vshll.u32 %v439, 16
        %v482 = vrot.slane %v480, 1
        %v483 = vor.u32 %v478, %v482
        %v485 = vshrl.u32 %v440, 16
        %v487 = vshll.u32 %v440, 16
        %v489 = vrot.slane %v487, 1
        %v490 = vor.u32 %v485, %v489
        %v492 = vshrl.u32 %v441, 16
        %v494 = vshll.u32 %v441, 16
        %v496 = vrot.slane %v494, 1
        %v497 = vor.u32 %v492, %v496
        %498 = vrot.lane.b32.xlu0 %v448, 8
        %v499 = vpop.permute.xlu0 %498
        %500 = vrot.lane.b32.xlu0 %v455, 8
        %v501 = vpop.permute.xlu0 %500
        %502 = vrot.lane.b32.xlu0 %v462, 8
        %v503 = vpop.permute.xlu0 %502
        %504 = vrot.lane.b32.xlu0 %v469, 8
        %v505 = vpop.permute.xlu0 %504
        %506 = vrot.lane.b32.xlu0 %v476, 8
        %v507 = vpop.permute.xlu0 %506
        %508 = vrot.lane.b32.xlu0 %v483, 8
        %v509 = vpop.permute.xlu0 %508
        %510 = vrot.lane.b32.xlu0 %v490, 8
        %v511 = vpop.permute.xlu0 %510
        %512 = vrot.lane.b32.xlu0 %v497, 8
        %v513 = vpop.permute.xlu0 %512
        %v522 = vunpack.c.l.b16 %v311
        %v523 = vunpack.c.l.b16 %v312
        %v524 = vunpack.c.l.b16 %v313
        %v525 = vunpack.c.l.b16 %v314
        %v526 = vunpack.c.l.b16 %v315
        %v527 = vunpack.c.l.b16 %v316
        %v528 = vunpack.c.l.b16 %v317
        %v529 = vunpack.c.l.b16 %v318
        %v530 = vpack.c.b16 %v522, %v522
        %v531 = vpack.c.b16 %v523, %v523
        %v532 = vpack.c.b16 %v524, %v524
        %v533 = vpack.c.b16 %v525, %v525
        %v534 = vpack.c.b16 %v526, %v526
        %v535 = vpack.c.b16 %v527, %v527
        %v536 = vpack.c.b16 %v528, %v528
        %v537 = vpack.c.b16 %v529, %v529
        %538 = vrot.lane.b32.xlu0 %v530, 12
        %v539 = vpop.permute.xlu0 %538
        %540 = vrot.lane.b32.xlu0 %v531, 12
        %v541 = vpop.permute.xlu0 %540
        %542 = vrot.lane.b32.xlu0 %v532, 12
        %v543 = vpop.permute.xlu0 %542
        %544 = vrot.lane.b32.xlu0 %v533, 12
        %v545 = vpop.permute.xlu0 %544
        %546 = vrot.lane.b32.xlu0 %v534, 12
        %v547 = vpop.permute.xlu0 %546
        %548 = vrot.lane.b32.xlu0 %v535, 12
        %v549 = vpop.permute.xlu0 %548
        %550 = vrot.lane.b32.xlu0 %v536, 12
        %v551 = vpop.permute.xlu0 %550
        %552 = vrot.lane.b32.xlu0 %v537, 12
        %v553 = vpop.permute.xlu0 %552
        %v562 = vunpack.c.l.b16 %v320
        %v563 = vunpack.c.l.b16 %v321
        %v564 = vunpack.c.l.b16 %v322
        %v565 = vunpack.c.l.b16 %v323
        %v566 = vunpack.c.l.b16 %v324
        %v567 = vunpack.c.l.b16 %v325
        %v568 = vunpack.c.l.b16 %v326
        %v569 = vunpack.c.l.b16 %v327
        %v570 = vpack.c.b16 %v562, %v562
        %v571 = vpack.c.b16 %v563, %v563
        %v572 = vpack.c.b16 %v564, %v564
        %v573 = vpack.c.b16 %v565, %v565
        %v574 = vpack.c.b16 %v566, %v566
        %v575 = vpack.c.b16 %v567, %v567
        %v576 = vpack.c.b16 %v568, %v568
        %v577 = vpack.c.b16 %v569, %v569
        %578 = vrot.lane.b32.xlu0 %v570, 16
        %v579 = vpop.permute.xlu0 %578
        %580 = vrot.lane.b32.xlu0 %v571, 16
        %v581 = vpop.permute.xlu0 %580
        %582 = vrot.lane.b32.xlu0 %v572, 16
        %v583 = vpop.permute.xlu0 %582
        %584 = vrot.lane.b32.xlu0 %v573, 16
        %v585 = vpop.permute.xlu0 %584
        %586 = vrot.lane.b32.xlu0 %v574, 16
        %v587 = vpop.permute.xlu0 %586
        %588 = vrot.lane.b32.xlu0 %v575, 16
        %v589 = vpop.permute.xlu0 %588
        %590 = vrot.lane.b32.xlu0 %v576, 16
        %v591 = vpop.permute.xlu0 %590
        %592 = vrot.lane.b32.xlu0 %v577, 16
        %v593 = vpop.permute.xlu0 %592
        %v602 = vunpack.c.l.b16 %v328
        %v603 = vunpack.c.l.b16 %v329
        %v604 = vunpack.c.l.b16 %v330
        %v605 = vunpack.c.l.b16 %v331
        %v606 = vunpack.c.l.b16 %v332
        %v607 = vunpack.c.l.b16 %v333
        %v608 = vunpack.c.l.b16 %v334
        %v609 = vunpack.c.l.b16 %v335
        %v610 = vpack.c.b16 %v602, %v522
        %v611 = vpack.c.b16 %v603, %v523
        %v612 = vpack.c.b16 %v604, %v524
        %v613 = vpack.c.b16 %v605, %v525
        %v614 = vpack.c.b16 %v606, %v526
        %v615 = vpack.c.b16 %v607, %v527
        %v616 = vpack.c.b16 %v608, %v528
        %v617 = vpack.c.b16 %v609, %v529
        %v619 = vshrl.u32 %v610, 16
        %v621 = vshll.u32 %v610, 16
        %v623 = vrot.slane %v621, 1
        %v624 = vor.u32 %v619, %v623
        %v626 = vshrl.u32 %v611, 16
        %v628 = vshll.u32 %v611, 16
        %v630 = vrot.slane %v628, 1
        %v631 = vor.u32 %v626, %v630
        %v633 = vshrl.u32 %v612, 16
        %v635 = vshll.u32 %v612, 16
        %v637 = vrot.slane %v635, 1
        %v638 = vor.u32 %v633, %v637
        %v640 = vshrl.u32 %v613, 16
        %v642 = vshll.u32 %v613, 16
        %v644 = vrot.slane %v642, 1
        %v645 = vor.u32 %v640, %v644
        %v647 = vshrl.u32 %v614, 16
        %v649 = vshll.u32 %v614, 16
        %v651 = vrot.slane %v649, 1
        %v652 = vor.u32 %v647, %v651
        %v654 = vshrl.u32 %v615, 16
        %v656 = vshll.u32 %v615, 16
        %v658 = vrot.slane %v656, 1
        %v659 = vor.u32 %v654, %v658
        %v661 = vshrl.u32 %v616, 16
        %v663 = vshll.u32 %v616, 16
        %v665 = vrot.slane %v663, 1
        %v666 = vor.u32 %v661, %v665
        %v668 = vshrl.u32 %v617, 16
        %v670 = vshll.u32 %v617, 16
        %v672 = vrot.slane %v670, 1
        %v673 = vor.u32 %v668, %v672
        %674 = vrot.lane.b32.xlu0 %v624, 20
        %v675 = vpop.permute.xlu0 %674
        %676 = vrot.lane.b32.xlu0 %v631, 20
        %v677 = vpop.permute.xlu0 %676
        %678 = vrot.lane.b32.xlu0 %v638, 20
        %v679 = vpop.permute.xlu0 %678
        %680 = vrot.lane.b32.xlu0 %v645, 20
        %v681 = vpop.permute.xlu0 %680
        %682 = vrot.lane.b32.xlu0 %v652, 20
        %v683 = vpop.permute.xlu0 %682
        %684 = vrot.lane.b32.xlu0 %v659, 20
        %v685 = vpop.permute.xlu0 %684
        %686 = vrot.lane.b32.xlu0 %v666, 20
        %v687 = vpop.permute.xlu0 %686
        %688 = vrot.lane.b32.xlu0 %v673, 20
        %v689 = vpop.permute.xlu0 %688
        %v698 = vunpack.c.l.b16 %v337
        %v699 = vunpack.c.l.b16 %v338
        %v700 = vunpack.c.l.b16 %v339
        %v701 = vunpack.c.l.b16 %v340
        %v702 = vunpack.c.l.b16 %v341
        %v703 = vunpack.c.l.b16 %v342
        %v704 = vunpack.c.l.b16 %v343
        %v705 = vunpack.c.l.b16 %v344
        %v706 = vpack.c.b16 %v698, %v698
        %v707 = vpack.c.b16 %v699, %v699
        %v708 = vpack.c.b16 %v700, %v700
        %v709 = vpack.c.b16 %v701, %v701
        %v710 = vpack.c.b16 %v702, %v702
        %v711 = vpack.c.b16 %v703, %v703
        %v712 = vpack.c.b16 %v704, %v704
        %v713 = vpack.c.b16 %v705, %v705
        %714 = vrot.lane.b32.xlu0 %v706, 24
        %v715 = vpop.permute.xlu0 %714
        %716 = vrot.lane.b32.xlu0 %v707, 24
        %v717 = vpop.permute.xlu0 %716
        %718 = vrot.lane.b32.xlu0 %v708, 24
        %v719 = vpop.permute.xlu0 %718
        %720 = vrot.lane.b32.xlu0 %v709, 24
        %v721 = vpop.permute.xlu0 %720
        %722 = vrot.lane.b32.xlu0 %v710, 24
        %v723 = vpop.permute.xlu0 %722
        %724 = vrot.lane.b32.xlu0 %v711, 24
        %v725 = vpop.permute.xlu0 %724
        %726 = vrot.lane.b32.xlu0 %v712, 24
        %v727 = vpop.permute.xlu0 %726
        %728 = vrot.lane.b32.xlu0 %v713, 24
        %v729 = vpop.permute.xlu0 %728
        %v738 = vunpack.c.l.b16 %v346
        %v739 = vunpack.c.l.b16 %v347
        %v740 = vunpack.c.l.b16 %v348
        %v741 = vunpack.c.l.b16 %v349
        %v742 = vunpack.c.l.b16 %v350
        %v743 = vunpack.c.l.b16 %v351
        %v744 = vunpack.c.l.b16 %v352
        %v745 = vunpack.c.l.b16 %v353
        %v746 = vpack.c.b16 %v738, %v738
        %v747 = vpack.c.b16 %v739, %v739
        %v748 = vpack.c.b16 %v740, %v740
        %v749 = vpack.c.b16 %v741, %v741
        %v750 = vpack.c.b16 %v742, %v742
        %v751 = vpack.c.b16 %v743, %v743
        %v752 = vpack.c.b16 %v744, %v744
        %v753 = vpack.c.b16 %v745, %v745
        %754 = vrot.lane.b32.xlu0 %v746, 28
        %v755 = vpop.permute.xlu0 %754
        %756 = vrot.lane.b32.xlu0 %v747, 28
        %v757 = vpop.permute.xlu0 %756
        %758 = vrot.lane.b32.xlu0 %v748, 28
        %v759 = vpop.permute.xlu0 %758
        %760 = vrot.lane.b32.xlu0 %v749, 28
        %v761 = vpop.permute.xlu0 %760
        %762 = vrot.lane.b32.xlu0 %v750, 28
        %v763 = vpop.permute.xlu0 %762
        %764 = vrot.lane.b32.xlu0 %v751, 28
        %v765 = vpop.permute.xlu0 %764
        %766 = vrot.lane.b32.xlu0 %v752, 28
        %v767 = vpop.permute.xlu0 %766
        %768 = vrot.lane.b32.xlu0 %v753, 28
        %v769 = vpop.permute.xlu0 %768
        %v778 = vunpack.c.l.b16 %v354
        %v779 = vunpack.c.l.b16 %v355
        %v780 = vunpack.c.l.b16 %v356
        %v781 = vunpack.c.l.b16 %v357
        %v782 = vunpack.c.l.b16 %v358
        %v783 = vunpack.c.l.b16 %v359
        %v784 = vunpack.c.l.b16 %v360
        %v785 = vunpack.c.l.b16 %v361
        %v786 = vpack.c.b16 %v778, %v698
        %v787 = vpack.c.b16 %v779, %v699
        %v788 = vpack.c.b16 %v780, %v700
        %v789 = vpack.c.b16 %v781, %v701
        %v790 = vpack.c.b16 %v782, %v702
        %v791 = vpack.c.b16 %v783, %v703
        %v792 = vpack.c.b16 %v784, %v704
        %v793 = vpack.c.b16 %v785, %v705
        %v795 = vshrl.u32 %v786, 16
        %v797 = vshll.u32 %v786, 16
        %v799 = vrot.slane %v797, 1
        %v800 = vor.u32 %v795, %v799
        %v802 = vshrl.u32 %v787, 16
        %v804 = vshll.u32 %v787, 16
        %v806 = vrot.slane %v804, 1
        %v807 = vor.u32 %v802, %v806
        %v809 = vshrl.u32 %v788, 16
        %v811 = vshll.u32 %v788, 16
        %v813 = vrot.slane %v811, 1
        %v814 = vor.u32 %v809, %v813
        %v816 = vshrl.u32 %v789, 16
        %v818 = vshll.u32 %v789, 16
        %v820 = vrot.slane %v818, 1
        %v821 = vor.u32 %v816, %v820
        %v823 = vshrl.u32 %v790, 16
        %v825 = vshll.u32 %v790, 16
        %v827 = vrot.slane %v825, 1
        %v828 = vor.u32 %v823, %v827
        %v830 = vshrl.u32 %v791, 16
        %v832 = vshll.u32 %v791, 16
        %v834 = vrot.slane %v832, 1
        %v835 = vor.u32 %v830, %v834
        %v837 = vshrl.u32 %v792, 16
        %v839 = vshll.u32 %v792, 16
        %v841 = vrot.slane %v839, 1
        %v842 = vor.u32 %v837, %v841
        %v844 = vshrl.u32 %v793, 16
        %v846 = vshll.u32 %v793, 16
        %v848 = vrot.slane %v846, 1
        %v849 = vor.u32 %v844, %v848
        %850 = vrot.lane.b32.xlu0 %v800, 32
        %v851 = vpop.permute.xlu0 %850
        %852 = vrot.lane.b32.xlu0 %v807, 32
        %v853 = vpop.permute.xlu0 %852
        %854 = vrot.lane.b32.xlu0 %v814, 32
        %v855 = vpop.permute.xlu0 %854
        %856 = vrot.lane.b32.xlu0 %v821, 32
        %v857 = vpop.permute.xlu0 %856
        %858 = vrot.lane.b32.xlu0 %v828, 32
        %v859 = vpop.permute.xlu0 %858
        %860 = vrot.lane.b32.xlu0 %v835, 32
        %v861 = vpop.permute.xlu0 %860
        %862 = vrot.lane.b32.xlu0 %v842, 32
        %v863 = vpop.permute.xlu0 %862
        %864 = vrot.lane.b32.xlu0 %v849, 32
        %v865 = vpop.permute.xlu0 %864
        %vm866 = vcmask 31744
        %v869 = vsel %vm866, %v285, %v387
        %v872 = vsel %vm866, %v286, %v389
        %v875 = vsel %vm866, %v287, %v391
        %v878 = vsel %vm866, %v288, %v393
        %v881 = vsel %vm866, %v289, %v395
        %v884 = vsel %vm866, %v290, %v397
        %v887 = vsel %vm866, %v291, %v399
        %v890 = vsel %vm866, %v292, %v401
        %vm891 = vcmask 64512
        %v893 = vsel %vm891, %v869, %v499
        %v895 = vsel %vm891, %v872, %v501
        %v897 = vsel %vm891, %v875, %v503
        %v899 = vsel %vm891, %v878, %v505
        %v901 = vsel %vm891, %v881, %v507
        %v903 = vsel %vm891, %v884, %v509
        %v905 = vsel %vm891, %v887, %v511
        %v907 = vsel %vm891, %v890, %v513
        %vm908 = vcmask 97280
        %v910 = vsel %vm908, %v893, %v539
        %v912 = vsel %vm908, %v895, %v541
        %v914 = vsel %vm908, %v897, %v543
        %v916 = vsel %vm908, %v899, %v545
        %v918 = vsel %vm908, %v901, %v547
        %v920 = vsel %vm908, %v903, %v549
        %v922 = vsel %vm908, %v905, %v551
        %v924 = vsel %vm908, %v907, %v553
        %vm925 = vcmask 130048
        %v927 = vsel %vm925, %v910, %v579
        %v929 = vsel %vm925, %v912, %v581
        %v931 = vsel %vm925, %v914, %v583
        %v933 = vsel %vm925, %v916, %v585
        %v935 = vsel %vm925, %v918, %v587
        %v937 = vsel %vm925, %v920, %v589
        %v939 = vsel %vm925, %v922, %v591
        %v941 = vsel %vm925, %v924, %v593
        %vm942 = vcmask 162816
        %v944 = vsel %vm942, %v927, %v675
        %v946 = vsel %vm942, %v929, %v677
        %v948 = vsel %vm942, %v931, %v679
        %v950 = vsel %vm942, %v933, %v681
        %v952 = vsel %vm942, %v935, %v683
        %v954 = vsel %vm942, %v937, %v685
        %v956 = vsel %vm942, %v939, %v687
        %v958 = vsel %vm942, %v941, %v689
        %vm959 = vcmask 195584
        %v961 = vsel %vm959, %v944, %v715
        %v963 = vsel %vm959, %v946, %v717
        %v965 = vsel %vm959, %v948, %v719
        %v967 = vsel %vm959, %v950, %v721
        %v969 = vsel %vm959, %v952, %v723
        %v971 = vsel %vm959, %v954, %v725
        %v973 = vsel %vm959, %v956, %v727
        %v975 = vsel %vm959, %v958, %v729
        %vm976 = vcmask 228352
        %v978 = vsel %vm976, %v961, %v755
        %v980 = vsel %vm976, %v963, %v757
        %v982 = vsel %vm976, %v965, %v759
        %v984 = vsel %vm976, %v967, %v761
        %v986 = vsel %vm976, %v969, %v763
        %v988 = vsel %vm976, %v971, %v765
        %v990 = vsel %vm976, %v973, %v767
        %v992 = vsel %vm976, %v975, %v769
        %vm993 = vcmask 261120
        %v995 = vsel %vm993, %v978, %v851
        %v997 = vsel %vm993, %v980, %v853
        %v999 = vsel %vm993, %v982, %v855
        %v1001 = vsel %vm993, %v984, %v857
        %v1003 = vsel %vm993, %v986, %v859
        %v1005 = vsel %vm993, %v988, %v861
        %v1007 = vsel %vm993, %v990, %v863
        %v1009 = vsel %vm993, %v992, %v865
        %v1010 = vld [vmem:[%s276] sm:$0xf]
        %v1011 = vld [vmem:[%s276 + $0x4] sm:$0xf]
        %v1012 = vld [vmem:[%s276 + $0x8] sm:$0xf]
        %v1013 = vld [vmem:[%s276 + $0xc] sm:$0xf]
        %v1014 = vld [vmem:[%s276 + $0x10] sm:$0x3]
        %v1023 = vunpack.c.l.b16 %v995
        %v1024 = vunpack.c.l.b16 %v997
        %v1025 = vunpack.c.l.b16 %v999
        %v1026 = vunpack.c.l.b16 %v1001
        %v1027 = vunpack.c.l.b16 %v1003
        %v1028 = vunpack.c.l.b16 %v1005
        %v1029 = vunpack.c.l.b16 %v1007
        %v1030 = vunpack.c.l.b16 %v1009
        %v1031 = vpack.c.b16 %v1024, %v1023
        %v1032 = vpack.c.b16 %v1026, %v1025
        %v1033 = vpack.c.b16 %v1028, %v1027
        %v1034 = vpack.c.b16 %v1030, %v1029
        %v1040 = vunpack.c.l.b16 %v1010
        %v1041 = vunpack.c.l.b16 %v1011
        %v1042 = vunpack.c.l.b16 %v1012
        %v1043 = vunpack.c.l.b16 %v1013
        %v1044 = vunpack.c.l.b16 %v1014
        %v1045 = vpack.c.b16 %v1041, %v1040
        %v1046 = vpack.c.b16 %v1043, %v1042
        %v1047 = vpack.c.b16 %v1044, %v1044
        %vm1050 = vcmask 293888
        %v1052 = vsel %vm1050, %v1031, 0
        %v1055 = vsel %vm1050, %v1032, 0
        %v1058 = vsel %vm1050, %v1033, 0
        %v1061 = vsel %vm1050, %v1034, 0
        %vm1063 = vcmask 1041408
        %v1065 = vsel %vm1063, %v1047, 0
        %1067 = vmatpush.bf16.msra.mxu0 0
        %1068 = vmatpush.bf16.msra.mxu0 0
        %1069 = vmatpush.bf16.msra.mxu0 0
        %1070 = vmatpush.bf16.msra.mxu0 0
        %1071 = vmatpush.bf16.msra.mxu0 0
        %1072 = vmatpush.bf16.msra.mxu0 %v1065
        %1073 = vmatpush.bf16.msra.mxu0 %v1046
        %1074 = vmatpush.bf16.msra.mxu0 %v1045
        %1075 = vmatmul.bf16.gmra.mxu0 %v1052
        %v1076 = vpop.f32.mrf.mxu0
        %v1077 = vadd.f32 0.0, %v1076
        %v1078 = vpop.f32.mrf.mxu0
        %v1079 = vadd.f32 0.0, %v1078
        %1080 = vmatmul.bf16.gmra.mxu0 %v1055
        %v1081 = vpop.f32.mrf.mxu0
        %v1082 = vadd.f32 0.0, %v1081
        %v1083 = vpop.f32.mrf.mxu0
        %v1084 = vadd.f32 0.0, %v1083
        %1085 = vmatmul.bf16.gmra.mxu0 %v1058
        %v1086 = vpop.f32.mrf.mxu0
        %v1087 = vadd.f32 0.0, %v1086
        %v1088 = vpop.f32.mrf.mxu0
        %v1089 = vadd.f32 0.0, %v1088
        %1090 = vmatmul.bf16.gmra.mxu0 %v1061
        %v1091 = vpop.f32.mrf.mxu0
        %v1092 = vadd.f32 0.0, %v1091
        %v1093 = vpop.f32.mrf.mxu0
        %v1094 = vadd.f32 0.0, %v1093
        %1095 = vdwg.mxu0
        %v1096 = vld [vmem:[%s279] sm:$0x1]
        %v1098 = vperm.slane %v1096, 0
        %v1100 = vmul.f32 %v1077, %v1098
        %v1101 = vmul.f32 %v1079, %v1098
        %v1102 = vmul.f32 %v1082, %v1098
        %v1103 = vmul.f32 %v1084, %v1098
        %v1104 = vmul.f32 %v1087, %v1098
        %v1105 = vmul.f32 %v1089, %v1098
        %v1106 = vmul.f32 %v1092, %v1098
        %v1107 = vmul.f32 %v1094, %v1098
        %v1108 = vld [vmem:[%s282] sm:$0x1]
        %v1110 = vperm.slane %v1108, 0
        %v1112 = vadd.f32 %v1100, %v1110
        %v1113 = vadd.f32 %v1101, %v1110
        %v1114 = vadd.f32 %v1102, %v1110
        %v1115 = vadd.f32 %v1103, %v1110
        %v1116 = vadd.f32 %v1104, %v1110
        %v1117 = vadd.f32 %v1105, %v1110
        %v1118 = vadd.f32 %v1106, %v1110
        %v1119 = vadd.f32 %v1107, %v1110
        %1120 = vst [vmem:[%s261] sm:$0xff] %v1112
        %1121 = vst [vmem:[%s261 + $0x8] sm:$0xff] %v1113
        %1122 = vst [vmem:[%s261 + $0x10] sm:$0xff] %v1114
        %1123 = vst [vmem:[%s261 + $0x18] sm:$0xff] %v1115
        %1124 = vst [vmem:[%s261 + $0x20] sm:$0xff] %v1116
        %1125 = vst [vmem:[%s261 + $0x28] sm:$0xff] %v1117
        %1126 = vst [vmem:[%s261 + $0x30] sm:$0xff] %v1118
        %1127 = vst [vmem:[%s261 + $0x38] sm:$0xff] %v1119
        %s1128 = sand.u32 %s155, 1
        %s1129 = scalar_lea.sflag [#allocation3], %s1128
        %s1130 = sand.u32 %s155, 1
        %s1131 = smul.addr %s1130, 64
        %s1132 = scalar_lea.vmem [#allocation2], %s1131
        // Predicated region
        $region37: #{downsample_forward.1} parent=35 // pred_check
          %p1133 = pneg %p165
        $region38: #{downsample_forward.1} parent=35 // pred_check_branch
          %1135 = sbr.rel (%p1133) target = $region40
        $region39: #{downsample_forward.1} parent=35 // pred_region
          %s1136 = smul.u32 8, %s25
          %1138 = vsyncadd %s1129, 0
          %s1139 = sadd.s32 %s24, %s1136
          %s1140 = smul.addr %s23, 8
          %s1141 = sadd.s32 %s1139, %s1140
          %s1142 = smul.addr %s1141, 8
          %s1143 = scalar_lea.hbm %s4, %s1142
          %s1144 = sshll.u32 %s1132, 4
          %s1145 = int_to_ptr.vmem [resolvable:$true] %s1144
          %s1146 = sshll.u32 %s1143, 4
          %s1147 = int_to_ptr.hbm [resolvable:$true] %s1146
          %1152 = dma.vmem_to_hbm [thread:$0]  %s1145, 1024, %s1147, %s1129, 128, 128, 8
        $region40: #{downsample_forward.1} parent=35 // pred_fallthru
          _
      $region36: #{downsample_forward.1} parent=5 // pred_fallthru
        _
      %p1153 = scmp.le.s32.totalorder 2, %s13
      // Predicated region
      $region41: #{downsample_forward.1} parent=5 // pred_check
        %p1154 = pneg %p1153
      $region42: #{downsample_forward.1} parent=5 // pred_check_branch
        %1156 = sbr.rel (%p1154) target = $region44
      $region43: #{downsample_forward.1} parent=5 // pred_region
        %s1157 = ssub.s32 %s13, 2
        // Predicated region
        $region45: #{downsample_forward.1} parent=43 // pred_check
          %p1158 = pneg %p171
        $region46: #{downsample_forward.1} parent=43 // pred_check_branch
          %1160 = sbr.rel (%p1158) target = $region48
        $region47: #{downsample_forward.1} parent=43 // pred_region
          %s1161 = sand.u32 %s156, 1
          %s1162 = scalar_lea.sflag [#allocation3], %s1161
          %s1163 = sand.u32 %s156, 1
          %s1164 = smul.addr %s1163, 64
          %s1165 = scalar_lea.vmem [#allocation2], %s1164
          %1167 = dma.done %s1162, 1024
        $region48: #{downsample_forward.1} parent=43 // pred_fallthru
          _
      $region44: #{downsample_forward.1} parent=5 // pred_fallthru
        _
    $region6: #{downsample_forward.1} parent=1 // loop_footer
      %s17 = sadd.s32 1, %s13
    $region7: #{downsample_forward.1} parent=1 // loop_footer_branch
      %12 = sbr.rel target = $region3
    $region8: #{downsample_forward.1} parent=1 // loop_exit
      _
    %1168 = vsyncpa [#allocation3], 1
    %s1169 = scalar_lea.sflag [#allocation3], 1
    %1170 = vsyncpa %s1169, 1

</llo_original>
